<compile_context>
chip_gen: v7x
topology: tpu7x:2x2x1
jax: 0.10.0
libtpu: 0.0.40
codegen_flags: <defaults>
</compile_context>

<pallas_src>
import functools

import jax
import jax.numpy as jnp
from jax.experimental import pallas as pl
from jax.experimental.pallas import tpu as pltpu


def _downsample_conv_kernel(x_ref, halo_ref, w_ref, b_ref, o_ref):
    """3x3 / stride-2 / pad-1 conv on one space-to-depth row tile.

    x_ref   : (1, TR, Wo, 4*Cin) bf16  main tile (output rows t*TR .. t*TR+TR-1)
    halo_ref: (1, 1,  Wo, 4*Cin) bf16  input row t*TR-1 (clamped; masked at t==0)
    w_ref   : (4*Cin, 4*Cout)    bf16  concatenated shift matrices [W00|W01|W10|W11]
    b_ref   : (1, Cout)          f32
    o_ref   : (1, TR*Wo, Cout)   f32
    """
    t = pl.program_id(1)
    _, TR, Wo, C4 = x_ref.shape
    Cout = o_ref.shape[2]
    P = TR * Wo

    # Contiguous, layout-preserving reshape (lane dim C4 unchanged) — no scratch copy.
    x_main = x_ref[0].reshape(P, C4)

    # One MXU contraction against all four shift matrices (bf16 in, f32 accumulate).
    y = jnp.dot(x_main, w_ref[...], preferred_element_type=jnp.float32)
    y00 = y[:, 0 * Cout:1 * Cout]      # needs X[i-1, j-1]
    y01 = y[:, 1 * Cout:2 * Cout]      # needs X[i-1, j  ]
    y10 = y[:, 2 * Cout:3 * Cout]      # needs X[i  , j-1]
    y11 = y[:, 3 * Cout:4 * Cout]      # needs X[i  , j  ]

    # Column shift right by one output pixel (zero at j == 0):
    # XLU sublane roll on the flattened row axis + VPU mask; overlaps the MXU.
    col = jax.lax.broadcasted_iota(jnp.int32, (P, 1), 0) % Wo
    keep = col != 0
    y00s = jnp.where(keep, pltpu.roll(y00, shift=1, axis=0), 0.0)
    y10s = jnp.where(keep, pltpu.roll(y10, shift=1, axis=0), 0.0)

    same_row = y11 + y10s      # contribution read at flattened index p
    row_above = y01 + y00s     # contribution read at flattened index p - Wo

    # Output rows i == 0 take 'row above' from the halo row (previous tile's
    # last input row) or zero padding at the very top of the image.
    h = jnp.dot(halo_ref[0, 0], w_ref[:, 0:2 * Cout],
                preferred_element_type=jnp.float32)            # (Wo, 2*Cout)
    h00 = h[:, 0:Cout]
    h01 = h[:, Cout:2 * Cout]
    keep_h = jax.lax.broadcasted_iota(jnp.int32, (Wo, 1), 0) != 0
    h_above = h01 + jnp.where(keep_h, pltpu.roll(h00, shift=1, axis=0), 0.0)
    h_above = jnp.where(t > 0, h_above, 0.0)                   # top zero padding

    bias = b_ref[...]                                          # f32 bias add
    o_ref[0, 0:Wo, :] = (same_row[0:Wo, :] + h_above + bias).astype(o_ref.dtype)
    if TR > 1:  # static Python condition
        o_ref[0, Wo:P, :] = (same_row[Wo:P, :] + row_above[0:P - Wo, :]
                             + bias).astype(o_ref.dtype)


def prepare_downsample_weights(w, b):
    """OIHW conv weights -> concatenated per-shift matrix (4*Cin, 4*Cout), bf16.

    Runs once at parameter-prep time (outside the jitted forward).  Phase blocks
    along the 4*Cin axis are ordered (ee, eo, oe, oo); output-column blocks are
    the 2x2 output shifts [W00 | W01 | W10 | W11].
    """
    Cout, Cin = w.shape[0], w.shape[1]
    wt = jnp.transpose(w, (2, 3, 1, 0)).astype(jnp.float32)     # (3, 3, Cin, Cout)
    z = jnp.zeros((Cin, Cout), jnp.float32)
    w00 = jnp.concatenate([z, z, z, wt[0, 0]], axis=0)                       # tap (0,0)
    w01 = jnp.concatenate([z, z, wt[0, 1], wt[0, 2]], axis=0)                # taps (0,1),(0,2)
    w10 = jnp.concatenate([z, wt[1, 0], z, wt[2, 0]], axis=0)                # taps (1,0),(2,0)
    w11 = jnp.concatenate([wt[1, 1], wt[1, 2], wt[2, 1], wt[2, 2]], axis=0)  # center block
    # TODO(synk): when MXU-bound (v5e), trim the structurally-zero Cin blocks of
    # W00/W01/W10 (needs Cin % 128 == 0 so the patch lane-slices stay aligned).
    w_cat = jnp.concatenate([w00, w01, w10, w11], axis=1).astype(jnp.bfloat16)
    return w_cat, b.reshape(1, Cout).astype(jnp.float32)


def _vmem_budget():
    """(vmem_limit_bytes, target_input_block_bytes) selected per TPU generation."""
    try:
        cap = int(pltpu.get_tpu_info().vmem_capacity_bytes)
    except Exception:
        cap = 64 * 1024 * 1024                       # conservative fallback
    if cap <= 64 * 1024 * 1024:                      # v7x: 64 MiB per TensorCore
        return 32 * 1024 * 1024, 2 << 20
    return 64 * 1024 * 1024, 4 << 20                 # v5e / v6e: 128 MiB


def _pick_row_tile(Ho, Wo, C4, target_bytes):
    """Largest divisor of Ho whose bf16 input block fits `target_bytes`.

    When the image is split (TR < Ho), TR*Wo must be a multiple of 8 so the
    output BlockSpec keeps sublane-aligned blocks.
    """
    row_bytes = Wo * C4 * 2                          # one bf16 input row
    if Ho * row_bytes <= target_bytes:
        return Ho
    for tr in range(Ho - 1, 0, -1):
        if Ho % tr == 0 and (tr * Wo) % 8 == 0 and tr * row_bytes <= target_bytes:
            return tr
    return Ho                                        # fallback: whole image per step


@functools.lru_cache(maxsize=1)
def _single_buffer_supported():
    """True if pipeline_mode=pl.Buffered(1) is accepted by this JAX/Mosaic build."""
    def _probe(x_ref, o_ref):
        o_ref[...] = x_ref[...]
    try:
        spec = pl.BlockSpec((8, 128), lambda i: (0, 0), pipeline_mode=pl.Buffered(1))
        out = pl.pallas_call(
            _probe,
            out_shape=jax.ShapeDtypeStruct((8, 128), jnp.float32),
            grid=(1,),
            in_specs=[spec],
            out_specs=pl.BlockSpec((8, 128), lambda i: (0, 0)),
        )(jnp.zeros((8, 128), jnp.float32))
        jax.block_until_ready(out)
        return True
    except Exception:
        return False


def downsample_forward(x_nchw, w_cat, bias_row):
    N, C, H, W = x_nchw.shape
    assert H % 2 == 0 and W % 2 == 0, "even spatial dims expected"
    # TODO(synk): odd H/W needs an extra bottom/right input phase (unused by UNet).
    Ho, Wo = H // 2, W // 2
    C4 = 4 * C
    Cout = w_cat.shape[1] // 4

    # Space-to-depth fused with the NCHW -> channels-last relayout, done in bf16
    # so the (unavoidable) transpose moves half the bytes.
    # TODO(synk): if the surrounding model stays channels-last (or the producer
    # emits the space-to-depth layout directly), this transpose and the output
    # transpose below disappear — the biggest remaining HBM saving for this
    # memory-bound op on v6e/v7x.
    xs = x_nchw.astype(jnp.bfloat16).reshape(N, C, Ho, 2, Wo, 2)
    xs = jnp.transpose(xs, (0, 2, 4, 3, 5, 1)).reshape(N, Ho, Wo, C4)

    vmem_limit, target_block = _vmem_budget()
    TR = _pick_row_tile(Ho, Wo, C4, target_block)
    grid = (N, Ho // TR)

    const_mode = (dict(pipeline_mode=pl.Buffered(1))
                  if _single_buffer_supported() else {})

    out = pl.pallas_call(
        _downsample_conv_kernel,
        out_shape=jax.ShapeDtypeStruct((N, Ho * Wo, Cout), jnp.float32),
        grid=grid,
        in_specs=[
            # main row tile of the space-to-depth input
            pl.BlockSpec((1, TR, Wo, C4), lambda n, t: (n, t, 0, 0)),
            # one-row halo: input row t*TR-1 (clamped; zeroed in-kernel at t == 0)
            pl.BlockSpec((1, 1, Wo, C4),
                         lambda n, t: (n, jnp.maximum(t * TR - 1, 0), 0, 0)),
            # grid-invariant operands: fetched once, single-buffered if supported
            pl.BlockSpec((C4, 4 * Cout), lambda n, t: (0, 0), **const_mode),
            pl.BlockSpec((1, Cout), lambda n, t: (0, 0), **const_mode),
        ],
        # NOTE: keep Cout >= 128 for production shapes so the store stays
        # lane-dense (the small demo Cout here is correctness-only).
        out_specs=pl.BlockSpec((1, TR * Wo, Cout), lambda n, t: (n, t, 0)),
        compiler_params=pltpu.CompilerParams(
            dimension_semantics=("parallel", "parallel"),
            vmem_limit_bytes=vmem_limit),
    )(xs, xs, w_cat, bias_row)

    # TODO(synk): emit bf16 here if the consumer accepts it (halves writeback).
    out = out.reshape(N, Ho, Wo, Cout)
    return jnp.transpose(out, (0, 3, 1, 2))          # channels-last -> NCHW


def downsample_reference(x, w, b):
    y = jax.lax.conv_general_dilated(
        x, w, window_strides=(2, 2), padding=[(1, 1), (1, 1)],
        dimension_numbers=("NCHW", "OIHW", "NCHW"))
    return y + b[None, :, None, None]


if __name__ == "__main__":
    N, C, H, W = 2, 4, 16, 16

    key = jax.random.PRNGKey(0)
    kx, kw, kb = jax.random.split(key, 3)
    x = jax.random.normal(kx, (N, C, H, W), jnp.float32)
    w = 0.1 * jax.random.normal(kw, (C, C, 3, 3), jnp.float32)
    b = 0.1 * jax.random.normal(kb, (C,), jnp.float32)

    # Weight relayout hoisted out of the jitted forward (param-prep time).
    w_cat, bias_row = prepare_downsample_weights(w, b)

    fwd = jax.jit(downsample_forward)
    out = jax.block_until_ready(fwd(x, w_cat, bias_row))
    assert out.shape == (N, C, H // 2, W // 2)

    ref = downsample_reference(x, w, b)
    err = float(jnp.max(jnp.abs(out - ref)))
    scale = max(float(jnp.max(jnp.abs(ref))), 1.0)
    assert err <= 2e-2 * scale, f"mismatch: max|err|={err}, scale={scale}"

    print("KERNEL_OK")
</pallas_src>

<mosaic_0001>
module attributes {stable_mosaic.version = 11 : i64} {
  func.func @_downsample_conv_kernel(%arg0: i32, %arg1: i32, %arg2: memref<1x8x8x16xbf16, #tpu.memory_space<vmem>>, %arg3: memref<1x1x8x16xbf16, #tpu.memory_space<vmem>>, %arg4: memref<16x16xbf16, #tpu.memory_space<vmem>>, %arg5: memref<1x4xf32, #tpu.memory_space<vmem>>, %arg6: memref<1x64x4xf32, #tpu.memory_space<vmem>>) attributes {dimension_semantics = [#tpu.dimension_semantics<parallel>, #tpu.dimension_semantics<parallel>], iteration_bounds = array<i64: 2, 1>, scalar_prefetch = 0 : i64, scratch_operands = 0 : i64, tpu.core_type = #tpu.core_type<tc>, window_params = [{transform_indices = @transform_0, window_bounds = array<i64: 1, 8, 8, 16>}, {transform_indices = @transform_1, window_bounds = array<i64: 1, 1, 8, 16>}, {pipeline_mode = #tpu.pipeline_mode<synchronous>, transform_indices = @transform_2, window_bounds = array<i64: 16, 16>}, {pipeline_mode = #tpu.pipeline_mode<synchronous>, transform_indices = @transform_3, window_bounds = array<i64: 1, 4>}, {transform_indices = @transform_4, window_bounds = array<i64: 1, 64, 4>}]} {
    %c0 = arith.constant 0 : index
    %c0_0 = arith.constant 0 : index
    %c0_1 = arith.constant 0 : index
    %c0_2 = arith.constant 0 : index
    %0 = vector.load %arg2[%c0, %c0_0, %c0_1, %c0_2] : memref<1x8x8x16xbf16, #tpu.memory_space<vmem>>, vector<1x8x8x16xbf16>
    %1 = vector.shape_cast %0 : vector<1x8x8x16xbf16> to vector<8x8x16xbf16>
    %2 = vector.shape_cast %1 : vector<8x8x16xbf16> to vector<64x16xbf16>
    %c0_3 = arith.constant 0 : index
    %c0_4 = arith.constant 0 : index
    %3 = vector.load %arg4[%c0_3, %c0_4] : memref<16x16xbf16, #tpu.memory_space<vmem>>, vector<16x16xbf16>
    %cst = arith.constant dense<0.000000e+00> : vector<64x16xf32>
    %4 = tpu.matmul %2, %3, %cst {dimension_numbers = #tpu.dot_dimension_numbers<[1], [0], [0], [1], [0, 0, 1, 1], [], []>} : vector<64x16xbf16>, vector<16x16xbf16>, vector<64x16xf32> -> vector<64x16xf32>
    %5 = vector.extract_strided_slice %4 {offsets = [0, 0], sizes = [64, 4], strides = [1, 1]} : vector<64x16xf32> to vector<64x4xf32>
    %6 = vector.extract_strided_slice %4 {offsets = [0, 4], sizes = [64, 4], strides = [1, 1]} : vector<64x16xf32> to vector<64x4xf32>
    %7 = vector.extract_strided_slice %4 {offsets = [0, 8], sizes = [64, 4], strides = [1, 1]} : vector<64x16xf32> to vector<64x4xf32>
    %8 = vector.extract_strided_slice %4 {offsets = [0, 12], sizes = [64, 4], strides = [1, 1]} : vector<64x16xf32> to vector<64x4xf32>
    %9 = tpu.iota {dimensions = array<i32: 0>} : vector<64x1xi32>
    %c8_i32 = arith.constant 8 : i32
    %c0_i32 = arith.constant 0 : i32
    %10 = arith.cmpi eq, %c8_i32, %c0_i32 : i32
    %c1_i32 = arith.constant 1 : i32
    %11 = arith.select %10, %c1_i32, %c8_i32 : i32
    %12 = vector.broadcast %11 : i32 to vector<64x1xi32>
    %13 = arith.remsi %9, %12 : vector<64x1xi32>
    %c0_i32_5 = arith.constant 0 : i32
    %14 = vector.broadcast %c0_i32_5 : i32 to vector<64x1xi32>
    %15 = arith.cmpi ne, %13, %14 : vector<64x1xi32>
    %c0_i32_6 = arith.constant 0 : i32
    %16 = vector.broadcast %c0_i32_6 : i32 to vector<64x1xi32>
    %17 = arith.cmpi slt, %13, %16 : vector<64x1xi32>
    %c0_i32_7 = arith.constant 0 : i32
    %18 = arith.cmpi slt, %11, %c0_i32_7 : i32
    %19 = vector.broadcast %18 : i1 to vector<64x1xi1>
    %20 = vector.broadcast %19 : vector<64x1xi1> to vector<64x1xi1>
    %21 = arith.xori %17, %20 : vector<64x1xi1>
    %22 = arith.andi %21, %15 : vector<64x1xi1>
    %23 = vector.broadcast %11 : i32 to vector<64x1xi32>
    %24 = arith.addi %13, %23 : vector<64x1xi32>
    %25 = arith.select %22, %24, %13 : vector<64x1xi1>, vector<64x1xi32>
    %c0_i32_8 = arith.constant 0 : i32
    %26 = vector.broadcast %c0_i32_8 : i32 to vector<64x1xi32>
    %27 = arith.cmpi ne, %25, %26 : vector<64x1xi32>
    %c1_i32_9 = arith.constant 1 : i32
    %28 = tpu.dynamic_rotate %5 by %c1_i32_9 dim 0 : vector<64x4xf32>, i32 -> vector<64x4xf32>
    %cst_10 = arith.constant 0.000000e+00 : f32
    %29 = vector.shape_cast %27 : vector<64x1xi1> to vector<64x1xi1>
    %30 = vector.broadcast %29 : vector<64x1xi1> to vector<64x4xi1>
    %31 = vector.broadcast %cst_10 : f32 to vector<64x4xf32>
    %32 = arith.select %30, %28, %31 : vector<64x4xi1>, vector<64x4xf32>
    %c1_i32_11 = arith.constant 1 : i32
    %33 = tpu.dynamic_rotate %7 by %c1_i32_11 dim 0 : vector<64x4xf32>, i32 -> vector<64x4xf32>
    %cst_12 = arith.constant 0.000000e+00 : f32
    %34 = vector.shape_cast %27 : vector<64x1xi1> to vector<64x1xi1>
    %35 = vector.broadcast %34 : vector<64x1xi1> to vector<64x4xi1>
    %36 = vector.broadcast %cst_12 : f32 to vector<64x4xf32>
    %37 = arith.select %35, %33, %36 : vector<64x4xi1>, vector<64x4xf32>
    %38 = arith.addf %8, %37 : vector<64x4xf32>
    %39 = arith.addf %6, %32 : vector<64x4xf32>
    %c0_13 = arith.constant 0 : index
    %c0_14 = arith.constant 0 : index
    %c0_15 = arith.constant 0 : index
    %c0_16 = arith.constant 0 : index
    %40 = vector.load %arg3[%c0_13, %c0_14, %c0_15, %c0_16] : memref<1x1x8x16xbf16, #tpu.memory_space<vmem>>, vector<1x1x8x16xbf16>
    %41 = vector.shape_cast %40 : vector<1x1x8x16xbf16> to vector<8x16xbf16>
    %c0_17 = arith.constant 0 : index
    %c0_18 = arith.constant 0 : index
    %42 = vector.load %arg4[%c0_17, %c0_18] : memref<16x16xbf16, #tpu.memory_space<vmem>>, vector<16x8xbf16>
    %cst_19 = arith.constant dense<0.000000e+00> : vector<8x8xf32>
    %43 = tpu.matmul %41, %42, %cst_19 {dimension_numbers = #tpu.dot_dimension_numbers<[1], [0], [0], [1], [0, 0, 1, 1], [], []>} : vector<8x16xbf16>, vector<16x8xbf16>, vector<8x8xf32> -> vector<8x8xf32>
    %44 = vector.extract_strided_slice %43 {offsets = [0, 0], sizes = [8, 4], strides = [1, 1]} : vector<8x8xf32> to vector<8x4xf32>
    %45 = vector.extract_strided_slice %43 {offsets = [0, 4], sizes = [8, 4], strides = [1, 1]} : vector<8x8xf32> to vector<8x4xf32>
    %46 = tpu.iota {dimensions = array<i32: 0>} : vector<8x1xi32>
    %c0_i32_20 = arith.constant 0 : i32
    %47 = vector.broadcast %c0_i32_20 : i32 to vector<8x1xi32>
    %48 = arith.cmpi ne, %46, %47 : vector<8x1xi32>
    %c1_i32_21 = arith.constant 1 : i32
    %49 = tpu.dynamic_rotate %44 by %c1_i32_21 dim 0 : vector<8x4xf32>, i32 -> vector<8x4xf32>
    %cst_22 = arith.constant 0.000000e+00 : f32
    %50 = vector.shape_cast %48 : vector<8x1xi1> to vector<8x1xi1>
    %51 = vector.broadcast %50 : vector<8x1xi1> to vector<8x4xi1>
    %52 = vector.broadcast %cst_22 : f32 to vector<8x4xf32>
    %53 = arith.select %51, %49, %52 : vector<8x4xi1>, vector<8x4xf32>
    %54 = arith.addf %45, %53 : vector<8x4xf32>
    %c0_i32_23 = arith.constant 0 : i32
    %55 = arith.cmpi sgt, %arg1, %c0_i32_23 : i32
    %cst_24 = arith.constant 0.000000e+00 : f32
    %56 = vector.broadcast %cst_24 : f32 to vector<8x4xf32>
    %57 = arith.select %55, %54, %56 : vector<8x4xf32>
    %c0_25 = arith.constant 0 : index
    %c0_26 = arith.constant 0 : index
    %58 = vector.load %arg5[%c0_25, %c0_26] : memref<1x4xf32, #tpu.memory_space<vmem>>, vector<1x4xf32>
    %59 = vector.extract_strided_slice %38 {offsets = [0, 0], sizes = [8, 4], strides = [1, 1]} : vector<64x4xf32> to vector<8x4xf32>
    %60 = arith.addf %59, %57 : vector<8x4xf32>
    %61 = vector.broadcast %58 : vector<1x4xf32> to vector<8x4xf32>
    %62 = arith.addf %60, %61 : vector<8x4xf32>
    %c0_27 = arith.constant 0 : index
    %c0_28 = arith.constant 0 : index
    %c0_29 = arith.constant 0 : index
    %63 = vector.load %arg6[%c0_27, %c0_28, %c0_29] : memref<1x64x4xf32, #tpu.memory_space<vmem>>, vector<1x8x4xf32>
    %64 = vector.shape_cast %63 : vector<1x8x4xf32> to vector<8x4xf32>
    %65 = vector.shape_cast %62 : vector<8x4xf32> to vector<1x8x4xf32>
    tpu.vector_store %arg6[%c0_27, %c0_28, %c0_29], %65 {strides = array<i32>} : memref<1x64x4xf32, #tpu.memory_space<vmem>>, vector<1x8x4xf32>,
    %66 = vector.extract_strided_slice %38 {offsets = [8, 0], sizes = [56, 4], strides = [1, 1]} : vector<64x4xf32> to vector<56x4xf32>
    %67 = vector.extract_strided_slice %39 {offsets = [0, 0], sizes = [56, 4], strides = [1, 1]} : vector<64x4xf32> to vector<56x4xf32>
    %68 = arith.addf %66, %67 : vector<56x4xf32>
    %69 = vector.broadcast %58 : vector<1x4xf32> to vector<56x4xf32>
    %70 = arith.addf %68, %69 : vector<56x4xf32>
    %c0_30 = arith.constant 0 : index
    %c8 = arith.constant 8 : index
    %c0_31 = arith.constant 0 : index
    %71 = vector.load %arg6[%c0_30, %c8, %c0_31] : memref<1x64x4xf32, #tpu.memory_space<vmem>>, vector<1x56x4xf32>
    %72 = vector.shape_cast %71 : vector<1x56x4xf32> to vector<56x4xf32>
    %73 = vector.shape_cast %70 : vector<56x4xf32> to vector<1x56x4xf32>
    tpu.vector_store %arg6[%c0_30, %c8, %c0_31], %73 {strides = array<i32>} : memref<1x64x4xf32, #tpu.memory_space<vmem>>, vector<1x56x4xf32>,
    return
  }
  func.func @transform_0(%arg0: i32, %arg1: i32) -> (i32, i32, i32, i32) {
    %c0_i32 = arith.constant 0 : i32
    %c0_i32_0 = arith.constant 0 : i32
    %c0_i32_1 = arith.constant 0 : i32
    return %arg0, %arg1, %c0_i32, %c0_i32_0 : i32, i32, i32, i32
  }
  func.func @transform_1(%arg0: i32, %arg1: i32) -> (i32, i32, i32, i32) {
    %c8_i32 = arith.constant 8 : i32
    %0 = arith.muli %arg1, %c8_i32 : i32
    %c1_i32 = arith.constant 1 : i32
    %1 = arith.subi %0, %c1_i32 : i32
    %c0_i32 = arith.constant 0 : i32
    %2 = arith.maxsi %1, %c0_i32 : i32
    %c0_i32_0 = arith.constant 0 : i32
    %c0_i32_1 = arith.constant 0 : i32
    %c0_i32_2 = arith.constant 0 : i32
    return %arg0, %2, %c0_i32_0, %c0_i32_1 : i32, i32, i32, i32
  }
  func.func @transform_2(%arg0: i32, %arg1: i32) -> (i32, i32) {
    %c0_i32 = arith.constant 0 : i32
    %c0_i32_0 = arith.constant 0 : i32
    %c0_i32_1 = arith.constant 0 : i32
    return %c0_i32, %c0_i32_0 : i32, i32
  }
  func.func @transform_3(%arg0: i32, %arg1: i32) -> (i32, i32) {
    %c0_i32 = arith.constant 0 : i32
    %c0_i32_0 = arith.constant 0 : i32
    %c0_i32_1 = arith.constant 0 : i32
    return %c0_i32, %c0_i32_0 : i32, i32
  }
  func.func @transform_4(%arg0: i32, %arg1: i32) -> (i32, i32, i32) {
    %c0_i32 = arith.constant 0 : i32
    %c0_i32_0 = arith.constant 0 : i32
    return %arg0, %arg1, %c0_i32 : i32, i32, i32
  }
}

</mosaic_0001>

<llo_original>
// kernel: downsample_forward.1
$region0: #{downsample_forward.1}
  #allocation0 [shape = 'u32[]', space=smem, size = 0x4, offset = 0x4, fixed_abs, tag = 'smem constant byte address 0x4 - core index']
  #allocation1 [shape = 'u32[144,128]{1,0:T(1,128)}', space=vmem, size = 0x12000, scoped, tag = 'internal scratch']
  %s0 = inlined_call_operand.vmem [shape: bf16[2,8,8,16], index: 0, kind: input, shape index: {}, may-alias: {0,1}]
  %s1 = inlined_call_operand.vmem [shape: bf16[2,8,8,16], index: 1, kind: input, shape index: {}, may-alias: {0,1}]
  %s2 = inlined_call_operand.vmem [shape: bf16[16,16], index: 2, kind: input, shape index: {}]
  %s3 = inlined_call_operand.vmem [shape: f32[1,4], index: 3, kind: input, shape index: {}]
  %s4 = inlined_call_operand.vmem [shape: f32[2,64,4], index: 4, kind: output, shape index: {}]
  %s5 = sld [smem:[#allocation0]]
  $region49: #{downsample_forward.1} parent=0
    _
  %s7 = ssub.s32 1, %s5
  %s8 = scalar_select 0, %s7, %s5
  loop: start=0, step=1, limit=4
  $region2: #{downsample_forward.1} parent=0 // loop_pre_header
    _
  $region3: #{downsample_forward.1} parent=0 // loop_header
    %s10 = sphi 0, %s14
    %p11 = scmp.ge.s32.totalorder %s10, 4
    %s17 = sphi 0, %s29
    %s18 = sphi 0, %s25
    %s19 = sphi 0, %s17
    %s20 = sphi 0, %s18
    %s21 = sphi 0, %s19
    %s22 = sphi 0, %s20
    %s34 = sphi 0, %s36
    %s37 = sphi 0, %s34
    %s38 = sphi 0, %s37
    %s54 = sphi 0, %s38
    %s70 = sphi 0, %s72
    %s73 = sphi 0, %s70
    %s74 = sphi 0, %s73
    %s90 = sphi 0, %s74
    %s94 = sphi 0, %s94
    %s96 = sphi 0, %s94
    %s97 = sphi 0, %s96
    %s111 = sphi 0, %s97
    %s115 = sphi 0, %s115
    %s117 = sphi 0, %s115
    %s118 = sphi 0, %s117
    %s132 = sphi 0, %s118
    %s140 = sphi 0, %s142
    %s143 = sphi 0, %s140
    %s144 = sphi 0, %s143
    %s160 = sphi 0, %s144
  $region4: #{downsample_forward.1} parent=0 // loop_header_branch
    %13 = sbr.rel (%p11) target = $region8
  $region5: #{downsample_forward.1} parent=0 // loop_body
    %s15 = ssub.s32 %s10, 1
    %s16 = ssub.s32 %s10, 2
    %s23 = sadd.s32 1, %s18
    %p24 = scmp.ge.s32.totalorder %s23, 1
    %s25 = scalar_select %p24, 0, %s23
    %s26 = sadd.s32 1, %s17
    %s27 = scalar_select %p24, %s26, %s17
    %p28 = scmp.ge.s32.totalorder %s27, 2
    %s29 = scalar_select %p28, 0, %s27
    %s30 = ssub.s32 %s17, %s29
    %s31 = ssub.s32 %s18, %s25
    %s32 = sor.u32 %s30, %s31
    %p33 = scmp.eq.s32.totalorder %s32, 0
    %s35 = sadd.s32 %s34, 1
    %s36 = scalar_select %p33, %s34, %s35
    %p39 = pneg %p33
    %p40 = scmp.eq.s32.totalorder %s10, 1
    %p41 = por %p39, %p40
    %p42 = scmp.ne.s32.totalorder %s34, %s37
    %p43 = scmp.eq.s32.totalorder %s10, 0
    %p44 = por %p42, %p43
    %p45 = scmp.ne.s32.totalorder %s34, %s37
    %p46 = scmp.eq.s32.totalorder %s15, 1
    %p47 = por %p45, %p46
    %p48 = scmp.ne.s32.totalorder %s37, %s38
    %p49 = scmp.eq.s32.totalorder %s15, 0
    %p50 = por %p48, %p49
    %p51 = scmp.ne.s32.totalorder %s37, %s38
    %p52 = scmp.eq.s32.totalorder %s16, 1
    %p53 = por %p51, %p52
    %p55 = scmp.ne.s32.totalorder %s38, %s54
    %p56 = scmp.eq.s32.totalorder %s16, 0
    %p57 = por %p55, %p56
    %s58 = smul.u32 %s18, 8
    %s59 = ssub.s32 %s58, 1
    %p60 = scmp.gt.s32.totalorder %s59, 0
    %s61 = scalar_select %p60, %s59, 0
    %s62 = smul.u32 %s25, 8
    %s63 = ssub.s32 %s62, 1
    %p64 = scmp.gt.s32.totalorder %s63, 0
    %s65 = scalar_select %p64, %s63, 0
    %s66 = ssub.s32 %s17, %s29
    %s67 = ssub.s32 %s61, %s65
    %s68 = sor.u32 %s66, %s67
    %p69 = scmp.eq.s32.totalorder %s68, 0
    %s71 = sadd.s32 %s70, 1
    %s72 = scalar_select %p69, %s70, %s71
    %p75 = pneg %p69
    %p76 = scmp.eq.s32.totalorder %s10, 1
    %p77 = por %p75, %p76
    %p78 = scmp.ne.s32.totalorder %s70, %s73
    %p79 = scmp.eq.s32.totalorder %s10, 0
    %p80 = por %p78, %p79
    %p81 = scmp.ne.s32.totalorder %s70, %s73
    %p82 = scmp.eq.s32.totalorder %s15, 1
    %p83 = por %p81, %p82
    %p84 = scmp.ne.s32.totalorder %s73, %s74
    %p85 = scmp.eq.s32.totalorder %s15, 0
    %p86 = por %p84, %p85
    %p87 = scmp.ne.s32.totalorder %s73, %s74
    %p88 = scmp.eq.s32.totalorder %s16, 1
    %p89 = por %p87, %p88
    %p91 = scmp.ne.s32.totalorder %s74, %s90
    %p92 = scmp.eq.s32.totalorder %s16, 0
    %p93 = por %p91, %p92
    %s95 = sadd.s32 %s94, 1
    %p98 = scmp.eq.s32.totalorder %s10, 1
    %p99 = scmp.ne.s32.totalorder %s94, %s96
    %p100 = scmp.eq.s32.totalorder %s10, 0
    %p101 = por %p99, %p100
    %p102 = scmp.ne.s32.totalorder %s94, %s96
    %p103 = scmp.eq.s32.totalorder %s15, 1
    %p104 = por %p102, %p103
    %p105 = scmp.ne.s32.totalorder %s96, %s97
    %p106 = scmp.eq.s32.totalorder %s15, 0
    %p107 = por %p105, %p106
    %p108 = scmp.ne.s32.totalorder %s96, %s97
    %p109 = scmp.eq.s32.totalorder %s16, 1
    %p110 = por %p108, %p109
    %p112 = scmp.ne.s32.totalorder %s97, %s111
    %p113 = scmp.eq.s32.totalorder %s16, 0
    %p114 = por %p112, %p113
    %s116 = sadd.s32 %s115, 1
    %p119 = scmp.eq.s32.totalorder %s10, 1
    %p120 = scmp.ne.s32.totalorder %s115, %s117
    %p121 = scmp.eq.s32.totalorder %s10, 0
    %p122 = por %p120, %p121
    %p123 = scmp.ne.s32.totalorder %s115, %s117
    %p124 = scmp.eq.s32.totalorder %s15, 1
    %p125 = por %p123, %p124
    %p126 = scmp.ne.s32.totalorder %s117, %s118
    %p127 = scmp.eq.s32.totalorder %s15, 0
    %p128 = por %p126, %p127
    %p129 = scmp.ne.s32.totalorder %s117, %s118
    %p130 = scmp.eq.s32.totalorder %s16, 1
    %p131 = por %p129, %p130
    %p133 = scmp.ne.s32.totalorder %s118, %s132
    %p134 = scmp.eq.s32.totalorder %s16, 0
    %p135 = por %p133, %p134
    %s136 = ssub.s32 %s17, %s29
    %s137 = ssub.s32 %s18, %s25
    %s138 = sor.u32 %s136, %s137
    %p139 = scmp.eq.s32.totalorder %s138, 0
    %s141 = sadd.s32 %s140, 1
    %s142 = scalar_select %p139, %s140, %s141
    %p145 = pneg %p139
    %p146 = scmp.eq.s32.totalorder %s10, 1
    %p147 = por %p145, %p146
    %p148 = scmp.ne.s32.totalorder %s140, %s143
    %p149 = scmp.eq.s32.totalorder %s10, 0
    %p150 = por %p148, %p149
    %p151 = scmp.ne.s32.totalorder %s140, %s143
    %p152 = scmp.eq.s32.totalorder %s15, 1
    %p153 = por %p151, %p152
    %p154 = scmp.ne.s32.totalorder %s143, %s144
    %p155 = scmp.eq.s32.totalorder %s15, 0
    %p156 = por %p154, %p155
    %p157 = scmp.ne.s32.totalorder %s143, %s144
    %p158 = scmp.eq.s32.totalorder %s16, 1
    %p159 = por %p157, %p158
    %p161 = scmp.ne.s32.totalorder %s144, %s160
    %p162 = scmp.eq.s32.totalorder %s16, 0
    %p163 = por %p161, %p162
    %p164 = scmp.le.s32.totalorder 1, %s10
    %p165 = scmp.lt.s32.totalorder %s10, 3
    %p166 = pnand %p164, %p165
    %p167 = pneg %p166
    // Predicated region
    $region9: #{downsample_forward.1} parent=5 // pred_check
      _
    $region10: #{downsample_forward.1} parent=5 // pred_check_branch
      %169 = sbr.rel (%p166) target = $region12
    $region11: #{downsample_forward.1} parent=5 // pred_region
      %s170 = ssub.s32 %s10, 1
      // Predicated region
      $region13: #{downsample_forward.1} parent=11 // pred_check
        %p171 = pneg %p107
      $region14: #{downsample_forward.1} parent=11 // pred_check_branch
        %173 = sbr.rel (%p171) target = $region16
      $region15: #{downsample_forward.1} parent=11 // pred_region
        _
      $region16: #{downsample_forward.1} parent=11 // pred_fallthru
        _
      // Predicated region
      $region17: #{downsample_forward.1} parent=11 // pred_check
        %p174 = pneg %p128
      $region18: #{downsample_forward.1} parent=11 // pred_check_branch
        %176 = sbr.rel (%p174) target = $region20
      $region19: #{downsample_forward.1} parent=11 // pred_region
        _
      $region20: #{downsample_forward.1} parent=11 // pred_fallthru
        _
    $region12: #{downsample_forward.1} parent=5 // pred_fallthru
      _
    %p177 = scmp.lt.s32.totalorder %s10, 2
    // Predicated region
    $region21: #{downsample_forward.1} parent=5 // pred_check
      %p178 = pneg %p177
    $region22: #{downsample_forward.1} parent=5 // pred_check_branch
      %180 = sbr.rel (%p178) target = $region24
    $region23: #{downsample_forward.1} parent=5 // pred_region
      // Predicated region
      $region25: #{downsample_forward.1} parent=23 // pred_check
        %p181 = pneg %p44
      $region26: #{downsample_forward.1} parent=23 // pred_check_branch
        %183 = sbr.rel (%p181) target = $region28
      $region27: #{downsample_forward.1} parent=23 // pred_region
        %s184 = smul.u32 8, %s18
        %p185 = scmp.lt.s32.totalorder %s17, 1
        %s186 = scalar_select %p185, %s17, 1
        %p187 = scmp.lt.s32.totalorder %s184, 7
        %s188 = scalar_select %p187, %s184, 7
        %s189 = smul.addr %s186, 8
        %s190 = sadd.s32 %s188, %s189
        %s191 = smul.addr %s190, 4
        %s192 = scalar_lea.vmem %s0, %s191
        %s193 = smul.u32 8, %s18
      $region28: #{downsample_forward.1} parent=23 // pred_fallthru
        _
      // Predicated region
      $region29: #{downsample_forward.1} parent=23 // pred_check
        %p194 = pneg %p80
      $region30: #{downsample_forward.1} parent=23 // pred_check_branch
        %196 = sbr.rel (%p194) target = $region32
      $region31: #{downsample_forward.1} parent=23 // pred_region
        %s197 = smul.u32 %s18, 8
        %s198 = ssub.s32 %s197, 1
        %p199 = scmp.gt.s32.totalorder %s198, 0
        %s200 = scalar_select %p199, %s198, 0
        %p201 = scmp.lt.s32.totalorder %s17, 1
        %s202 = scalar_select %p201, %s17, 1
        %p203 = scmp.lt.s32.totalorder %s200, 7
        %s204 = scalar_select %p203, %s200, 7
        %s205 = smul.addr %s202, 8
        %s206 = sadd.s32 %s204, %s205
        %s207 = smul.addr %s206, 4
        %s208 = scalar_lea.vmem %s1, %s207
        %s209 = smul.u32 %s18, 8
        %s210 = ssub.s32 %s209, 1
        %p211 = scmp.gt.s32.totalorder %s210, 0
        %s212 = scalar_select %p211, %s210, 0
      $region32: #{downsample_forward.1} parent=23 // pred_fallthru
        _
    $region24: #{downsample_forward.1} parent=5 // pred_fallthru
      _
    %p213 = scmp.le.s32.totalorder 1, %s10
    %p214 = scmp.lt.s32.totalorder %s10, 3
    %p215 = pnand %p213, %p214
    %p216 = pneg %p215
    // Predicated region
    $region33: #{downsample_forward.1} parent=5 // pred_check
      _
    $region34: #{downsample_forward.1} parent=5 // pred_check_branch
      %218 = sbr.rel (%p215) target = $region36
    $region35: #{downsample_forward.1} parent=5 // pred_region
      %s219 = ssub.s32 %s10, 1
      %s220 = smul.u32 8, %s20
      %p221 = scmp.lt.s32.totalorder %s19, 1
      %s222 = scalar_select %p221, %s19, 1
      %p223 = scmp.lt.s32.totalorder %s220, 7
      %s224 = scalar_select %p223, %s220, 7
      %s225 = smul.addr %s222, 8
      %s226 = sadd.s32 %s224, %s225
      %s227 = smul.addr %s226, 4
      %s228 = scalar_lea.vmem %s0, %s227
      %p229 = pneg %p50
      %p230 = pneg %p47
      %s231 = smul.u32 %s20, 8
      %s232 = ssub.s32 %s231, 1
      %p233 = scmp.gt.s32.totalorder %s232, 0
      %s234 = scalar_select %p233, %s232, 0
      %p235 = scmp.lt.s32.totalorder %s19, 1
      %s236 = scalar_select %p235, %s19, 1
      %p237 = scmp.lt.s32.totalorder %s234, 7
      %s238 = scalar_select %p237, %s234, 7
      %s239 = smul.addr %s236, 8
      %s240 = sadd.s32 %s238, %s239
      %s241 = smul.addr %s240, 4
      %s242 = scalar_lea.vmem %s1, %s241
      %p243 = pneg %p86
      %p244 = pneg %p83
      %p245 = pneg %p107
      %p246 = pneg %p104
      %p247 = pneg %p128
      %p248 = pneg %p125
      %p249 = pneg %p156
      %p250 = pneg %p153
      %s251 = smul.u32 8, %s20
      %p252 = scmp.lt.s32.totalorder %s19, 1
      %s253 = scalar_select %p252, %s19, 1
      %p254 = scmp.lt.s32.totalorder %s251, 7
      %s255 = scalar_select %p254, %s251, 7
      %s256 = smul.addr %s253, 8
      %s257 = sadd.s32 %s255, %s256
      %s258 = smul.addr %s257, 8
      %s259 = scalar_lea.vmem %s4, %s258
      %s260 = smul.u32 8, %s20
      %p261 = scmp.lt.s32.totalorder %s19, 1
      %s262 = scalar_select %p261, %s19, 1
      %p263 = scmp.lt.s32.totalorder %s260, 7
      %s264 = scalar_select %p263, %s260, 7
      %s265 = smul.addr %s262, 8
      %s266 = sadd.s32 %s264, %s265
      %s267 = smul.addr %s266, 4
      %s268 = scalar_lea.vmem %s0, %s267
      %s269 = smul.u32 8, %s20
      %s270 = smul.u32 %s20, 8
      %s271 = ssub.s32 %s270, 1
      %p272 = scmp.gt.s32.totalorder %s271, 0
      %s273 = scalar_select %p272, %s271, 0
      %p274 = scmp.lt.s32.totalorder %s19, 1
      %s275 = scalar_select %p274, %s19, 1
      %p276 = scmp.lt.s32.totalorder %s273, 7
      %s277 = scalar_select %p276, %s273, 7
      %s278 = smul.addr %s275, 8
      %s279 = sadd.s32 %s277, %s278
      %s280 = smul.addr %s279, 4
      %s281 = scalar_lea.vmem %s1, %s280
      %s282 = smul.u32 %s20, 8
      %s283 = ssub.s32 %s282, 1
      %p284 = scmp.gt.s32.totalorder %s283, 0
      %s285 = scalar_select %p284, %s283, 0
      %s286 = smul.u32 8, %s20
      %p287 = scmp.lt.s32.totalorder %s19, 1
      %s288 = scalar_select %p287, %s19, 1
      %p289 = scmp.lt.s32.totalorder %s286, 7
      %s290 = scalar_select %p289, %s286, 7
      %s291 = smul.addr %s288, 8
      %s292 = sadd.s32 %s290, %s291
      %s293 = smul.addr %s292, 8
      %s294 = scalar_lea.vmem %s4, %s293
      %s295 = smul.u32 8, %s20
      %v297 = vld [vmem:[%s268] sm:$0xf]
      %v298 = vld [vmem:[%s268 + $0x4] sm:$0xf]
      %v299 = vld [vmem:[%s268 + $0x8] sm:$0xf]
      %v300 = vld [vmem:[%s268 + $0xc] sm:$0xf]
      %v301 = vld [vmem:[%s268 + $0x10] sm:$0xf]
      %v302 = vld [vmem:[%s268 + $0x14] sm:$0xf]
      %v303 = vld [vmem:[%s268 + $0x18] sm:$0xf]
      %v304 = vld [vmem:[%s268 + $0x1c] sm:$0xf]
      %v305 = vld [vmem:[%s2] sm:$0xf]
      %v306 = vld [vmem:[%s2 + $0x4] sm:$0xf]
      %v315 = vunpack.c.l.b16 %v297
      %v316 = vunpack.c.l.b16 %v298
      %v317 = vunpack.c.l.b16 %v299
      %v318 = vunpack.c.l.b16 %v300
      %v319 = vunpack.c.l.b16 %v301
      %v320 = vunpack.c.l.b16 %v302
      %v321 = vunpack.c.l.b16 %v303
      %v322 = vunpack.c.l.b16 %v304
      %v323 = vpack.c.b16 %v316, %v315
      %v324 = vpack.c.b16 %v318, %v317
      %v325 = vpack.c.b16 %v320, %v319
      %v326 = vpack.c.b16 %v322, %v321
      %v329 = vunpack.c.l.b16 %v305
      %v330 = vunpack.c.l.b16 %v306
      %v331 = vpack.c.b16 %v330, %v329
      %vm333 = vcmask 130048
      %v335 = vsel %vm333, %v323, 0
      %v338 = vsel %vm333, %v324, 0
      %v341 = vsel %vm333, %v325, 0
      %v344 = vsel %vm333, %v326, 0
      %346 = vmatprep.subr.bf16.mxu0 0
      %347 = vmatpush1.bf16.msra.mxu0 %v331
      %348 = vmatprep.subr.bf16.mxu0 0
      %349 = vmatpush1.bf16.msra.mxu0 0
      %350 = vmatprep.subr.bf16.mxu0 0
      %351 = vmatpush1.bf16.msra.mxu0 0
      %352 = vmatprep.subr.bf16.mxu0 0
      %353 = vmatpush1.bf16.msra.mxu0 0
      %354 = vmatprep.subr.bf16.mxu0 0
      %355 = vmatpush1.bf16.msra.mxu0 0
      %356 = vmatprep.subr.bf16.mxu0 0
      %357 = vmatpush1.bf16.msra.mxu0 0
      %358 = vmatprep.subr.bf16.mxu0 0
      %359 = vmatpush1.bf16.msra.mxu0 0
      %360 = vmatprep.subr.bf16.mxu0 0
      %361 = vmatpush1.bf16.msra.mxu0 0
      %362 = vmatprep.subr.bf16.mxu0 0
      %363 = vmatpush1.bf16.msra.mxu0 0
      %364 = vmatprep.subr.bf16.mxu0 0
      %365 = vmatpush1.bf16.msra.mxu0 0
      %366 = vmatprep.subr.bf16.mxu0 0
      %367 = vmatpush1.bf16.msra.mxu0 0
      %368 = vmatprep.subr.bf16.mxu0 0
      %369 = vmatpush1.bf16.msra.mxu0 0
      %370 = vmatprep.subr.bf16.mxu0 0
      %371 = vmatpush1.bf16.msra.mxu0 0
      %372 = vmatprep.subr.bf16.mxu0 0
      %373 = vmatpush1.bf16.msra.mxu0 0
      %374 = vmatprep.subr.bf16.mxu0 0
      %375 = vmatpush1.bf16.msra.mxu0 0
      %376 = vmatprep.subr.bf16.mxu0 0
      %377 = vmatpush1.bf16.msra.mxu0 0
      %378 = vmatprep.mubr.bf16.mxu0 0
      %379 = vmatmul.mubr.bf16.gmra.mrb[0].mxu0 %v335
      %v380 = vpop.f32.mrb[0].mxu0
      %v381 = vadd.f32 0.0, %v380
      %v382 = vpop.f32.mrb[0].mxu0
      %v383 = vpop.f32.mrb[0].mxu0
      %v384 = vadd.f32 0.0, %v383
      %v385 = vpop.f32.mrb[0].mxu0
      %386 = vmatprep.mubr.bf16.mxu0 0
      %387 = vmatmul.mubr.bf16.gmra.mrb[0].mxu0 %v338
      %v388 = vpop.f32.mrb[0].mxu0
      %v389 = vadd.f32 0.0, %v388
      %v390 = vpop.f32.mrb[0].mxu0
      %v391 = vpop.f32.mrb[0].mxu0
      %v392 = vadd.f32 0.0, %v391
      %v393 = vpop.f32.mrb[0].mxu0
      %394 = vmatprep.mubr.bf16.mxu0 0
      %395 = vmatmul.mubr.bf16.gmra.mrb[0].mxu0 %v341
      %v396 = vpop.f32.mrb[0].mxu0
      %v397 = vadd.f32 0.0, %v396
      %v398 = vpop.f32.mrb[0].mxu0
      %v399 = vpop.f32.mrb[0].mxu0
      %v400 = vadd.f32 0.0, %v399
      %v401 = vpop.f32.mrb[0].mxu0
      %402 = vmatprep.mubr.bf16.mxu0 0
      %403 = vmatmul.mubr.bf16.gmra.mrb[0].mxu0 %v344
      %v404 = vpop.f32.mrb[0].mxu0
      %v405 = vadd.f32 0.0, %v404
      %v406 = vpop.f32.mrb[0].mxu0
      %v407 = vpop.f32.mrb[0].mxu0
      %v408 = vadd.f32 0.0, %v407
      %v409 = vpop.f32.mrb[0].mxu0
      %410 = vdwg.mxu0
      %v411 = vlaneseq
      %v412 = vshrl.u32 %v411, 7
      %v413 = vadd.s32 %v412, 8
      %v414 = vadd.s32 %v412, 16
      %v415 = vadd.s32 %v412, 24
      %v416 = vadd.s32 %v412, 32
      %v417 = vadd.s32 %v412, 40
      %v418 = vadd.s32 %v412, 48
      %v419 = vadd.s32 %v412, 56
      %vm420 = vcmp.lt.s32.totalorder %v412, 0
      %v421 = vsub.s32 0, %v412
      %v422 = vsel %vm420, %v421, %v412
      %v423 = vshrl.u32 %v422, 3
      %v424 = vand.u32 %v422, 7
      %v425 = vsub.s32 0, %v424
      %v426 = vsel %vm420, %v425, %v424
      %vm427 = vcmp.lt.s32.totalorder %v413, 0
      %v428 = vsub.s32 0, %v413
      %v429 = vsel %vm427, %v428, %v413
      %v430 = vshrl.u32 %v429, 3
      %v431 = vand.u32 %v429, 7
      %v432 = vsub.s32 0, %v431
      %v433 = vsel %vm427, %v432, %v431
      %vm434 = vcmp.lt.s32.totalorder %v414, 0
      %v435 = vsub.s32 0, %v414
      %v436 = vsel %vm434, %v435, %v414
      %v437 = vshrl.u32 %v436, 3
      %v438 = vand.u32 %v436, 7
      %v439 = vsub.s32 0, %v438
      %v440 = vsel %vm434, %v439, %v438
      %vm441 = vcmp.lt.s32.totalorder %v415, 0
      %v442 = vsub.s32 0, %v415
      %v443 = vsel %vm441, %v442, %v415
      %v444 = vshrl.u32 %v443, 3
      %v445 = vand.u32 %v443, 7
      %v446 = vsub.s32 0, %v445
      %v447 = vsel %vm441, %v446, %v445
      %vm448 = vcmp.lt.s32.totalorder %v416, 0
      %v449 = vsub.s32 0, %v416
      %v450 = vsel %vm448, %v449, %v416
      %v451 = vshrl.u32 %v450, 3
      %v452 = vand.u32 %v450, 7
      %v453 = vsub.s32 0, %v452
      %v454 = vsel %vm448, %v453, %v452
      %vm455 = vcmp.lt.s32.totalorder %v417, 0
      %v456 = vsub.s32 0, %v417
      %v457 = vsel %vm455, %v456, %v417
      %v458 = vshrl.u32 %v457, 3
      %v459 = vand.u32 %v457, 7
      %v460 = vsub.s32 0, %v459
      %v461 = vsel %vm455, %v460, %v459
      %vm462 = vcmp.lt.s32.totalorder %v418, 0
      %v463 = vsub.s32 0, %v418
      %v464 = vsel %vm462, %v463, %v418
      %v465 = vshrl.u32 %v464, 3
      %v466 = vand.u32 %v464, 7
      %v467 = vsub.s32 0, %v466
      %v468 = vsel %vm462, %v467, %v466
      %vm469 = vcmp.lt.s32.totalorder %v419, 0
      %v470 = vsub.s32 0, %v419
      %v471 = vsel %vm469, %v470, %v419
      %v472 = vshrl.u32 %v471, 3
      %v473 = vand.u32 %v471, 7
      %v474 = vsub.s32 0, %v473
      %v475 = vsel %vm469, %v474, %v473
      %vm476 = vcmp.ne.s32.totalorder %v426, 0
      %vm477 = vcmp.ne.s32.totalorder %v433, 0
      %vm478 = vcmp.ne.s32.totalorder %v440, 0
      %vm479 = vcmp.ne.s32.totalorder %v447, 0
      %vm480 = vcmp.ne.s32.totalorder %v454, 0
      %vm481 = vcmp.ne.s32.totalorder %v461, 0
      %vm482 = vcmp.ne.s32.totalorder %v468, 0
      %vm483 = vcmp.ne.s32.totalorder %v475, 0
      %vm484 = vcmp.lt.s32.totalorder %v426, 0
      %vm485 = vcmp.lt.s32.totalorder %v433, 0
      %vm486 = vcmp.lt.s32.totalorder %v440, 0
      %vm487 = vcmp.lt.s32.totalorder %v447, 0
      %vm488 = vcmp.lt.s32.totalorder %v454, 0
      %vm489 = vcmp.lt.s32.totalorder %v461, 0
      %vm490 = vcmp.lt.s32.totalorder %v468, 0
      %vm491 = vcmp.lt.s32.totalorder %v475, 0
      %vm492 = vmand %vm484, %vm476
      %vm493 = vmand %vm485, %vm477
      %vm494 = vmand %vm486, %vm478
      %vm495 = vmand %vm487, %vm479
      %vm496 = vmand %vm488, %vm480
      %vm497 = vmand %vm489, %vm481
      %vm498 = vmand %vm490, %vm482
      %vm499 = vmand %vm491, %vm483
      %v500 = vadd.s32 %v426, 8
      %v501 = vadd.s32 %v433, 8
      %v502 = vadd.s32 %v440, 8
      %v503 = vadd.s32 %v447, 8
      %v504 = vadd.s32 %v454, 8
      %v505 = vadd.s32 %v461, 8
      %v506 = vadd.s32 %v468, 8
      %v507 = vadd.s32 %v475, 8
      %v508 = vsel %vm492, %v500, %v426
      %v509 = vsel %vm493, %v501, %v433
      %v510 = vsel %vm494, %v502, %v440
      %v511 = vsel %vm495, %v503, %v447
      %v512 = vsel %vm496, %v504, %v454
      %v513 = vsel %vm497, %v505, %v461
      %v514 = vsel %vm498, %v506, %v468
      %v515 = vsel %vm499, %v507, %v475
      %vm516 = vcmp.ne.s32.totalorder %v508, 0
      %vm517 = vcmp.ne.s32.totalorder %v509, 0
      %vm518 = vcmp.ne.s32.totalorder %v510, 0
      %vm519 = vcmp.ne.s32.totalorder %v511, 0
      %vm520 = vcmp.ne.s32.totalorder %v512, 0
      %vm521 = vcmp.ne.s32.totalorder %v513, 0
      %vm522 = vcmp.ne.s32.totalorder %v514, 0
      %vm523 = vcmp.ne.s32.totalorder %v515, 0
      %v524 = vrot.slane %v381, 7
      %v525 = vrot.slane %v384, 7
      %v526 = vrot.slane %v389, 7
      %v527 = vrot.slane %v392, 7
      %v528 = vrot.slane %v397, 7
      %v529 = vrot.slane %v400, 7
      %v530 = vrot.slane %v405, 7
      %v531 = vrot.slane %v408, 7
      %vm532 = vcmp.lt.s32.totalorder %v412, 1
      %v533 = vsel %vm532, %v529, %v530
      %v534 = vsel %vm532, %v528, %v529
      %v535 = vsel %vm532, %v527, %v528
      %v536 = vsel %vm532, %v526, %v527
      %v537 = vsel %vm532, %v525, %v526
      %v538 = vsel %vm532, %v524, %v525
      %v539 = vsel %vm532, %v531, %v524
      %v540 = vsel %vm516, 1, 0
      %v541 = vsel %vm517, 1, 0
      %v542 = vsel %vm518, 1, 0
      %v543 = vsel %vm519, 1, 0
      %v544 = vsel %vm520, 1, 0
      %v545 = vsel %vm521, 1, 0
      %v546 = vsel %vm522, 1, 0
      %v547 = vsel %vm523, 1, 0
      %vm548 = vcmp.eq.s32.totalorder %v540, 1
      %vm549 = vcmp.eq.s32.totalorder %v541, 1
      %vm550 = vcmp.eq.s32.totalorder %v542, 1
      %vm551 = vcmp.eq.s32.totalorder %v543, 1
      %vm552 = vcmp.eq.s32.totalorder %v544, 1
      %vm553 = vcmp.eq.s32.totalorder %v545, 1
      %vm554 = vcmp.eq.s32.totalorder %v546, 1
      %vm555 = vcmp.eq.s32.totalorder %v547, 1
      %v556 = vsel %vm548, %v539, 0.0
      %v557 = vsel %vm549, %v538, 0.0
      %v558 = vsel %vm550, %v537, 0.0
      %v559 = vsel %vm551, %v536, 0.0
      %v560 = vsel %vm552, %v535, 0.0
      %v561 = vsel %vm553, %v534, 0.0
      %v562 = vsel %vm554, %v533, 0.0
      %571 = vrot.lane.b32.xlu0 %v381, 120
      %v572 = vpop.permute.xlu0 %571
      %573 = vrot.lane.b32.xlu0 %v384, 120
      %v574 = vpop.permute.xlu0 %573
      %575 = vrot.lane.b32.xlu0 %v389, 120
      %v576 = vpop.permute.xlu0 %575
      %577 = vrot.lane.b32.xlu0 %v392, 120
      %v578 = vpop.permute.xlu0 %577
      %579 = vrot.lane.b32.xlu0 %v397, 120
      %v580 = vpop.permute.xlu0 %579
      %581 = vrot.lane.b32.xlu0 %v400, 120
      %v582 = vpop.permute.xlu0 %581
      %583 = vrot.lane.b32.xlu0 %v405, 120
      %v584 = vpop.permute.xlu0 %583
      %585 = vrot.lane.b32.xlu0 %v408, 120
      %v586 = vpop.permute.xlu0 %585
      %v595 = vrot.slane %v572, 7
      %v596 = vrot.slane %v574, 7
      %v597 = vrot.slane %v576, 7
      %v598 = vrot.slane %v578, 7
      %v599 = vrot.slane %v580, 7
      %v600 = vrot.slane %v582, 7
      %v601 = vrot.slane %v584, 7
      %v602 = vrot.slane %v586, 7
      %v603 = vsel %vm532, %v601, %v602
      %v604 = vsel %vm532, %v600, %v601
      %v605 = vsel %vm532, %v599, %v600
      %v606 = vsel %vm532, %v598, %v599
      %v607 = vsel %vm532, %v597, %v598
      %v608 = vsel %vm532, %v596, %v597
      %v609 = vsel %vm532, %v595, %v596
      %v610 = vsel %vm532, %v602, %v595
      %v611 = vsel %vm548, %v610, 0.0
      %v612 = vsel %vm549, %v609, 0.0
      %v613 = vsel %vm550, %v608, 0.0
      %v614 = vsel %vm551, %v607, 0.0
      %v615 = vsel %vm552, %v606, 0.0
      %v616 = vsel %vm553, %v605, 0.0
      %v617 = vsel %vm554, %v604, 0.0
      %v618 = vsel %vm555, %v603, 0.0
      %627 = vrot.lane.b32.xlu0 %v611, 12
      %v628 = vpop.permute.xlu0 %627
      %629 = vrot.lane.b32.xlu0 %v612, 12
      %v630 = vpop.permute.xlu0 %629
      %631 = vrot.lane.b32.xlu0 %v613, 12
      %v632 = vpop.permute.xlu0 %631
      %633 = vrot.lane.b32.xlu0 %v614, 12
      %v634 = vpop.permute.xlu0 %633
      %635 = vrot.lane.b32.xlu0 %v615, 12
      %v636 = vpop.permute.xlu0 %635
      %637 = vrot.lane.b32.xlu0 %v616, 12
      %v638 = vpop.permute.xlu0 %637
      %639 = vrot.lane.b32.xlu0 %v617, 12
      %v640 = vpop.permute.xlu0 %639
      %641 = vrot.lane.b32.xlu0 %v618, 12
      %v642 = vpop.permute.xlu0 %641
      %v651 = vadd.f32 %v381, %v628
      %v652 = vadd.f32 %v384, %v630
      %v653 = vadd.f32 %v389, %v632
      %v654 = vadd.f32 %v392, %v634
      %v655 = vadd.f32 %v397, %v636
      %v656 = vadd.f32 %v400, %v638
      %v657 = vadd.f32 %v405, %v640
      %v658 = vadd.f32 %v408, %v642
      %666 = vrot.lane.b32.xlu0 %v556, 4
      %v667 = vpop.permute.xlu0 %666
      %668 = vrot.lane.b32.xlu0 %v557, 4
      %v669 = vpop.permute.xlu0 %668
      %670 = vrot.lane.b32.xlu0 %v558, 4
      %v671 = vpop.permute.xlu0 %670
      %672 = vrot.lane.b32.xlu0 %v559, 4
      %v673 = vpop.permute.xlu0 %672
      %674 = vrot.lane.b32.xlu0 %v560, 4
      %v675 = vpop.permute.xlu0 %674
      %676 = vrot.lane.b32.xlu0 %v561, 4
      %v677 = vpop.permute.xlu0 %676
      %678 = vrot.lane.b32.xlu0 %v562, 4
      %v679 = vpop.permute.xlu0 %678
      %v687 = vadd.f32 %v381, %v667
      %v688 = vadd.f32 %v384, %v669
      %v689 = vadd.f32 %v389, %v671
      %v690 = vadd.f32 %v392, %v673
      %v691 = vadd.f32 %v397, %v675
      %v692 = vadd.f32 %v400, %v677
      %v693 = vadd.f32 %v405, %v679
      %v694 = vld [vmem:[%s281] sm:$0xf]
      %v696 = vsel %vm333, %v694, 0
      %698 = vmatprep.subr.bf16.mxu0 0
      %699 = vmatpush1.bf16.msra.mxu0 %v331
      %700 = vmatprep.subr.bf16.mxu0 0
      %701 = vmatpush1.bf16.msra.mxu0 0
      %702 = vmatprep.subr.bf16.mxu0 0
      %703 = vmatpush1.bf16.msra.mxu0 0
      %704 = vmatprep.subr.bf16.mxu0 0
      %705 = vmatpush1.bf16.msra.mxu0 0
      %706 = vmatprep.subr.bf16.mxu0 0
      %707 = vmatpush1.bf16.msra.mxu0 0
      %708 = vmatprep.subr.bf16.mxu0 0
      %709 = vmatpush1.bf16.msra.mxu0 0
      %710 = vmatprep.subr.bf16.mxu0 0
      %711 = vmatpush1.bf16.msra.mxu0 0
      %712 = vmatprep.subr.bf16.mxu0 0
      %713 = vmatpush1.bf16.msra.mxu0 0
      %714 = vmatprep.subr.bf16.mxu0 0
      %715 = vmatpush1.bf16.msra.mxu0 0
      %716 = vmatprep.subr.bf16.mxu0 0
      %717 = vmatpush1.bf16.msra.mxu0 0
      %718 = vmatprep.subr.bf16.mxu0 0
      %719 = vmatpush1.bf16.msra.mxu0 0
      %720 = vmatprep.subr.bf16.mxu0 0
      %721 = vmatpush1.bf16.msra.mxu0 0
      %722 = vmatprep.subr.bf16.mxu0 0
      %723 = vmatpush1.bf16.msra.mxu0 0
      %724 = vmatprep.subr.bf16.mxu0 0
      %725 = vmatpush1.bf16.msra.mxu0 0
      %726 = vmatprep.subr.bf16.mxu0 0
      %727 = vmatpush1.bf16.msra.mxu0 0
      %728 = vmatprep.subr.bf16.mxu0 0
      %729 = vmatpush1.bf16.msra.mxu0 0
      %730 = vmatprep.mubr.bf16.mxu0 0
      %731 = vmatmul.mubr.bf16.gmra.mrb[0].mxu0 %v696
      %v732 = vpop.f32.mrb[0].mxu0
      %v733 = vadd.f32 0.0, %v732
      %v734 = vpop.f32.mrb[0].mxu0
      %v735 = vpop.f32.mrb[0].mxu0
      %v736 = vpop.f32.mrb[0].mxu0
      %737 = vdwg.mxu0
      %vm738 = vcmp.ne.s32.totalorder %v412, 0
      %v739 = vrot.slane %v733, 7
      %v740 = vsel %vm738, 1, 0
      %vm741 = vcmp.eq.s32.totalorder %v740, 1
      %v742 = vsel %vm741, %v739, 0.0
      %744 = vrot.lane.b32.xlu0 %v742, 4
      %v745 = vpop.permute.xlu0 %744
      %v747 = vadd.f32 %v733, %v745
      %p748 = scmp.gt.s32.totalorder %s20, 0
      %s749 = scalar_select %p748, 1, 0
      %v750 = vstv %s749
      %vm751 = vcmp.eq.s32.totalorder %v750, 1
      %v752 = vsel %vm751, %v747, 0.0
      %v753 = vld [vmem:[%s3] sm:$0x1]
      %755 = vrot.lane.b32.xlu0 %v752, 8
      %v756 = vpop.permute.xlu0 %755
      %v758 = vadd.f32 %v651, %v756
      %v760 = vlaneseq
      %v761 = vshrl.u32 %v760, 7
      %v762 = vsub.s32 0, %v761
      %v763 = vrot.slane %v753, %v762
      %764 = vrot.lane.b32.xlu0 %v763, 12
      %v765 = vpop.permute.xlu0 %764
      %v767 = vadd.f32 %v758, %v765
      %769 = vrot.lane.b32.xlu0 %v767, 116
      %v770 = vpop.permute.xlu0 %769
      %vm772 = vcmask 31744
      %773 = vst.msk [vmem:[%s294] sm:$0xff] %vm772, %v770
      %781 = vrot.lane.b32.xlu0 %v687, 8
      %v782 = vpop.permute.xlu0 %781
      %783 = vrot.lane.b32.xlu0 %v688, 8
      %v784 = vpop.permute.xlu0 %783
      %785 = vrot.lane.b32.xlu0 %v689, 8
      %v786 = vpop.permute.xlu0 %785
      %787 = vrot.lane.b32.xlu0 %v690, 8
      %v788 = vpop.permute.xlu0 %787
      %789 = vrot.lane.b32.xlu0 %v691, 8
      %v790 = vpop.permute.xlu0 %789
      %791 = vrot.lane.b32.xlu0 %v692, 8
      %v792 = vpop.permute.xlu0 %791
      %793 = vrot.lane.b32.xlu0 %v693, 8
      %v794 = vpop.permute.xlu0 %793
      %v802 = vadd.f32 %v652, %v782
      %v803 = vadd.f32 %v653, %v784
      %v804 = vadd.f32 %v654, %v786
      %v805 = vadd.f32 %v655, %v788
      %v806 = vadd.f32 %v656, %v790
      %v807 = vadd.f32 %v657, %v792
      %v808 = vadd.f32 %v658, %v794
      %v809 = vadd.f32 %v802, %v765
      %v810 = vadd.f32 %v803, %v765
      %v811 = vadd.f32 %v804, %v765
      %v812 = vadd.f32 %v805, %v765
      %v813 = vadd.f32 %v806, %v765
      %v814 = vadd.f32 %v807, %v765
      %v815 = vadd.f32 %v808, %v765
      %823 = vrot.lane.b32.xlu0 %v809, 116
      %v824 = vpop.permute.xlu0 %823
      %825 = vrot.lane.b32.xlu0 %v810, 116
      %v826 = vpop.permute.xlu0 %825
      %827 = vrot.lane.b32.xlu0 %v811, 116
      %v828 = vpop.permute.xlu0 %827
      %829 = vrot.lane.b32.xlu0 %v812, 116
      %v830 = vpop.permute.xlu0 %829
      %831 = vrot.lane.b32.xlu0 %v813, 116
      %v832 = vpop.permute.xlu0 %831
      %833 = vrot.lane.b32.xlu0 %v814, 116
      %v834 = vpop.permute.xlu0 %833
      %835 = vrot.lane.b32.xlu0 %v815, 116
      %v836 = vpop.permute.xlu0 %835
      %844 = vst.msk [vmem:[%s294 + $0x8] sm:$0xff] %vm772, %v824
      %845 = vst.msk [vmem:[%s294 + $0x10] sm:$0xff] %vm772, %v826
      %846 = vst.msk [vmem:[%s294 + $0x18] sm:$0xff] %vm772, %v828
      %847 = vst.msk [vmem:[%s294 + $0x20] sm:$0xff] %vm772, %v830
      %848 = vst.msk [vmem:[%s294 + $0x28] sm:$0xff] %vm772, %v832
      %849 = vst.msk [vmem:[%s294 + $0x30] sm:$0xff] %vm772, %v834
      %850 = vst.msk [vmem:[%s294 + $0x38] sm:$0xff] %vm772, %v836
      %s851 = smul.u32 8, %s20
      %p852 = scmp.lt.s32.totalorder %s19, 1
      %s853 = scalar_select %p852, %s19, 1
      %p854 = scmp.lt.s32.totalorder %s851, 7
      %s855 = scalar_select %p854, %s851, 7
      %s856 = smul.addr %s853, 8
      %s857 = sadd.s32 %s855, %s856
      %s858 = smul.addr %s857, 8
      %s859 = scalar_lea.vmem %s4, %s858
      // Predicated region
      $region37: #{downsample_forward.1} parent=35 // pred_check
        %p860 = pneg %p153
      $region38: #{downsample_forward.1} parent=35 // pred_check_branch
        %862 = sbr.rel (%p860) target = $region40
      $region39: #{downsample_forward.1} parent=35 // pred_region
        %s863 = smul.u32 8, %s20
      $region40: #{downsample_forward.1} parent=35 // pred_fallthru
        _
    $region36: #{downsample_forward.1} parent=5 // pred_fallthru
      _
    %p864 = scmp.le.s32.totalorder 2, %s10
    // Predicated region
    $region41: #{downsample_forward.1} parent=5 // pred_check
      %p865 = pneg %p864
    $region42: #{downsample_forward.1} parent=5 // pred_check_branch
      %867 = sbr.rel (%p865) target = $region44
    $region43: #{downsample_forward.1} parent=5 // pred_region
      %s868 = ssub.s32 %s10, 2
      // Predicated region
      $region45: #{downsample_forward.1} parent=43 // pred_check
        %p869 = pneg %p159
      $region46: #{downsample_forward.1} parent=43 // pred_check_branch
        %871 = sbr.rel (%p869) target = $region48
      $region47: #{downsample_forward.1} parent=43 // pred_region
        %s872 = smul.u32 8, %s22
        %p873 = scmp.lt.s32.totalorder %s21, 1
        %s874 = scalar_select %p873, %s21, 1
        %p875 = scmp.lt.s32.totalorder %s872, 7
        %s876 = scalar_select %p875, %s872, 7
        %s877 = smul.addr %s874, 8
        %s878 = sadd.s32 %s876, %s877
        %s879 = smul.addr %s878, 8
        %s880 = scalar_lea.vmem %s4, %s879
      $region48: #{downsample_forward.1} parent=43 // pred_fallthru
        _
    $region44: #{downsample_forward.1} parent=5 // pred_fallthru
      _
  $region6: #{downsample_forward.1} parent=0 // loop_footer
    %s14 = sadd.s32 1, %s10
  $region7: #{downsample_forward.1} parent=0 // loop_footer_branch
    %9 = sbr.rel target = $region3
  $region8: #{downsample_forward.1} parent=0 // loop_exit
    _

</llo_original>
